<compile_context>
chip_gen: v7x
topology: tpu7x:2x2x1
jax: 0.10.0
libtpu: 0.0.40
codegen_flags: <defaults>
</compile_context>

<pallas_src>
import jax
import jax.numpy as jnp
from jax.experimental import pallas as pl
from jax.experimental.pallas import tpu as pltpu


def _round_up(x: int, m: int) -> int:
    return ((x + m - 1) // m) * m


def latent_classifier_kernel(x_ref, w1_ref, b1_ref, w2_ref, b2_ref, out_ref):
    """Fused MLP + softmax for one row tile.

    x_ref  : (TM, Hp)   native-dtype flattened latents (one row tile)
    w1_ref : (Hp, H2p)  bf16 first Linear weight (in, out), zero-padded
    b1_ref : (1, H2p)   f32  first Linear bias, zero-padded
    w2_ref : (H2p, Cp)  bf16 second Linear weight, class dim padded to 128
    b2_ref : (1, Cp)    f32  second Linear bias (padded classes = -1e30)
    out_ref: (TM, Cp)   bf16 softmax probabilities (padded classes -> 0)
    """
    # Cast x to bf16 in-kernel (no-op if the wrapper already emitted bf16);
    # the VPU cast hides under the input DMA.
    x = x_ref[...].astype(jnp.bfloat16)

    # Linear 1 + ReLU: bf16 operands on the MXU, f32 accumulation.
    h = jnp.dot(x, w1_ref[...], preferred_element_type=jnp.float32)
    h = jnp.maximum(h + b1_ref[...], 0.0)

    # Linear 2: re-cast activations to bf16 so the MXU sees bf16 x bf16.
    logits = jnp.dot(h.astype(jnp.bfloat16), w2_ref[...],
                     preferred_element_type=jnp.float32)
    logits = logits + b2_ref[...]          # padded classes get -1e30 -> prob 0

    # Numerically stable softmax over the (padded) class / lane axis.
    m = jnp.max(logits, axis=-1, keepdims=True)
    e = jnp.exp(logits - m)
    denom = jnp.sum(e, axis=-1, keepdims=True)
    inv = 1.0 / denom                      # exact: each row sums to 1
    out_ref[...] = (e * inv).astype(out_ref.dtype)


def _vmem_footprint_bytes(tm, hp, h2p, cp, x_bytes, weight_bufs):
    """Rough per-step VMEM footprint used to size TM."""
    weights = weight_bufs * (hp * h2p * 2 + h2p * 4 + h2p * cp * 2 + cp * 4)
    x_io = 2 * tm * hp * x_bytes           # double-buffered input tile
    out_io = 2 * tm * cp * 2               # double-buffered bf16 output tile
    inter = tm * (h2p * (4 + 2) + cp * (4 + 4 + 2))   # h (f32+bf16), logits/e
    return weights + x_io + out_io + inter


def latent_classifier(x, w1, b1, w2, b2, *, tm_target=1024):
    """x: (B, S, H) latents -> (B, S, C) float32 softmax probabilities."""
    B, S, H = x.shape
    H2 = w1.shape[1]
    C = w2.shape[1]
    M = B * S

    # Lane-dense padding of all minor dims (no-op when already 128-multiples).
    Hp = _round_up(H, 128)
    H2p = _round_up(H2, 128)
    Cp = _round_up(C, 128)

    # Generation-aware VMEM budget (v5e/v6e: 128 MiB, v7x: 64 MiB per TC).
    try:
        vmem_cap = int(pltpu.get_tpu_info().vmem_capacity_bytes)
    except Exception:
        vmem_cap = 64 * 1024 * 1024        # conservative (v7x per-TC)
    vmem_limit = max(32 * 1024 * 1024,
                     min(vmem_cap - 16 * 1024 * 1024, 96 * 1024 * 1024))

    # TODO(synk): if the resident weights alone (Hp*H2p + H2p*Cp in bf16)
    # exceed the VMEM budget (possible on v7x at H ~ 4k), add a K-tiling grid
    # axis over Hp with an f32 VMEM accumulator (pl.when init/finalize)
    # instead of full-weight residency.

    # --- Row (M) tiling: 16-aligned (bf16 output sublane packing), as large
    #     as the VMEM budget allows, and >= 2 tiles when M is big enough so
    #     v7x's two TensorCores both get work on the "parallel" axis.
    ROW_ALIGN = 16
    x_bytes = jnp.dtype(x.dtype).itemsize
    TM = min(tm_target, _round_up(M, ROW_ALIGN))
    while (TM > ROW_ALIGN and
           _vmem_footprint_bytes(TM, Hp, H2p, Cp, x_bytes, 2)
           > 0.7 * vmem_limit):
        TM = max(ROW_ALIGN, _round_up(TM // 2, ROW_ALIGN))
    if M >= 2 * ROW_ALIGN and pl.cdiv(M, TM) < 2:
        TM = _round_up(pl.cdiv(M, 2), ROW_ALIGN)
    Mp = _round_up(M, TM)
    num_tiles = Mp // TM

    # --- Input: avoid a separate wrapper-side cast pass.  If any padding is
    #     required the pad copy is unavoidable, so fold the bf16 cast into it;
    #     otherwise pass x in its native dtype and let the kernel cast.
    x2d = x.reshape(M, H)
    if (Hp != H) or (Mp != M):
        x2d = jnp.pad(x2d.astype(jnp.bfloat16), ((0, Mp - M), (0, Hp - H)))
    x_in_bytes = jnp.dtype(x2d.dtype).itemsize

    # --- Weights / biases: zero-pad (mathematical no-op), bf16 weights for
    #     the MXU, f32 biases (keeping the -1e30 padded-class bias in f32).
    w1p = jnp.pad(w1.astype(jnp.bfloat16), ((0, Hp - H), (0, H2p - H2)))
    b1p = jnp.pad(b1.astype(jnp.float32).reshape(1, H2),
                  ((0, 0), (0, H2p - H2)))
    w2p = jnp.pad(w2.astype(jnp.bfloat16), ((0, H2p - H2), (0, Cp - C)))
    b2p = jnp.pad(b2.astype(jnp.float32).reshape(1, C),
                  ((0, 0), (0, Cp - C)), constant_values=-1e30)

    # Cost estimate reflecting what the kernel actually moves (native-dtype x,
    # resident bf16 weights, bf16 padded output).
    bytes_accessed = (
        Mp * Hp * x_in_bytes
        + Hp * H2p * 2 + H2p * 4
        + H2p * Cp * 2 + Cp * 4
        + Mp * Cp * 2
    )
    cost = pl.CostEstimate(
        flops=2 * Mp * (Hp * H2p + H2p * Cp),
        transcendentals=Mp * Cp,
        bytes_accessed=bytes_accessed,
    )

    def build_call(weight_pipeline_mode):
        kw = ({} if weight_pipeline_mode is None
              else {"pipeline_mode": weight_pipeline_mode})
        in_specs = [
            pl.BlockSpec((TM, Hp), lambda i: (i, 0)),          # row tile of x
            pl.BlockSpec((Hp, H2p), lambda i: (0, 0), **kw),   # resident w1
            pl.BlockSpec((1, H2p), lambda i: (0, 0), **kw),    # resident b1
            pl.BlockSpec((H2p, Cp), lambda i: (0, 0), **kw),   # resident w2
            pl.BlockSpec((1, Cp), lambda i: (0, 0), **kw),     # resident b2
        ]
        return pl.pallas_call(
            latent_classifier_kernel,
            out_shape=jax.ShapeDtypeStruct((Mp, Cp), jnp.bfloat16),
            grid_spec=pltpu.PrefetchScalarGridSpec(
                num_scalar_prefetch=0,
                grid=(num_tiles,),
                in_specs=in_specs,
                out_specs=pl.BlockSpec((TM, Cp), lambda i: (i, 0)),
            ),
            compiler_params=pltpu.CompilerParams(
                # Row tiles are independent -> shard across v7x's two TCs.
                dimension_semantics=("parallel",),
                vmem_limit_bytes=int(vmem_limit),
            ),
            cost_estimate=cost,
        )

    try:
        # Single-buffered resident weights (halves their VMEM footprint).
        out2d = build_call(pl.Buffered(1))(x2d, w1p, b1p, w2p, b2p)
        jax.block_until_ready(out2d)
    except Exception:
        # Fallback: default double buffering if Buffered(1) is unsupported.
        out2d = build_call(None)(x2d, w1p, b1p, w2p, b2p)

    # Drop row padding and padded class columns; return f32 like the module.
    return out2d[:M, :C].astype(jnp.float32).reshape(B, S, C)


def reference(x, w1, b1, w2, b2):
    h = jnp.maximum(x @ w1 + b1.reshape(1, -1), 0.0)
    logits = h @ w2 + b2.reshape(1, -1)
    return jax.nn.softmax(logits, axis=-1)


if __name__ == "__main__":
    # Small shapes consistent with a latent classifier:
    # batch=2, seq=8, hidden=32, hidden2=32, num_classes=8
    B, S, H, H2, C = 2, 8, 32, 32, 8

    key = jax.random.PRNGKey(0)
    kx, kw1, kb1, kw2, kb2 = jax.random.split(key, 5)

    x = jax.random.normal(kx, (B, S, H), dtype=jnp.float32)
    # Deterministic synthetic parameters (not a checkpoint load).
    w1 = jax.random.normal(kw1, (H, H2), dtype=jnp.float32) * 0.1
    b1 = jax.random.normal(kb1, (1, H2), dtype=jnp.float32) * 0.01
    w2 = jax.random.normal(kw2, (H2, C), dtype=jnp.float32) * 0.1
    b2 = jax.random.normal(kb2, (1, C), dtype=jnp.float32) * 0.01

    out = latent_classifier(x, w1, b1, w2, b2)
    jax.block_until_ready(out)

    ref = reference(x, w1, b1, w2, b2)
    assert out.shape == (B, S, C)
    # Exact softmax divide -> rows sum to 1 up to the bf16 output rounding.
    assert jnp.allclose(jnp.sum(out, axis=-1), 1.0, atol=1e-2)
    # bf16 MXU operands + bf16 output -> relaxed tolerance vs f32 reference.
    assert jnp.allclose(out, ref, atol=2e-2, rtol=2e-2)

    print("KERNEL_OK")
</pallas_src>

<mosaic_0001>
module attributes {stable_mosaic.version = 11 : i64} {
  func.func @latent_classifier_kernel(%arg0: i32, %arg1: memref<16x128xbf16, #tpu.memory_space<vmem>>, %arg2: memref<128x128xbf16, #tpu.memory_space<vmem>>, %arg3: memref<1x128xf32, #tpu.memory_space<vmem>>, %arg4: memref<128x128xbf16, #tpu.memory_space<vmem>>, %arg5: memref<1x128xf32, #tpu.memory_space<vmem>>, %arg6: memref<16x128xbf16, #tpu.memory_space<vmem>>) attributes {dimension_semantics = [#tpu.dimension_semantics<parallel>], iteration_bounds = array<i64: 1>, scalar_prefetch = 0 : i64, scratch_operands = 0 : i64, tpu.core_type = #tpu.core_type<tc>, window_params = [{transform_indices = @transform_0, window_bounds = array<i64: 16, 128>}, {pipeline_mode = #tpu.pipeline_mode<synchronous>, transform_indices = @transform_1, window_bounds = array<i64: 128, 128>}, {pipeline_mode = #tpu.pipeline_mode<synchronous>, transform_indices = @transform_2, window_bounds = array<i64: 1, 128>}, {pipeline_mode = #tpu.pipeline_mode<synchronous>, transform_indices = @transform_3, window_bounds = array<i64: 128, 128>}, {pipeline_mode = #tpu.pipeline_mode<synchronous>, transform_indices = @transform_4, window_bounds = array<i64: 1, 128>}, {transform_indices = @transform_5, window_bounds = array<i64: 16, 128>}]} {
    %c0 = arith.constant 0 : index
    %c0_0 = arith.constant 0 : index
    %0 = vector.load %arg1[%c0, %c0_0] : memref<16x128xbf16, #tpu.memory_space<vmem>>, vector<16x128xbf16>
    %c0_1 = arith.constant 0 : index
    %c0_2 = arith.constant 0 : index
    %1 = vector.load %arg2[%c0_1, %c0_2] : memref<128x128xbf16, #tpu.memory_space<vmem>>, vector<128x128xbf16>
    %cst = arith.constant dense<0.000000e+00> : vector<16x128xf32>
    %2 = tpu.matmul %0, %1, %cst {dimension_numbers = #tpu.dot_dimension_numbers<[1], [0], [0], [1], [0, 0, 1, 1], [], []>} : vector<16x128xbf16>, vector<128x128xbf16>, vector<16x128xf32> -> vector<16x128xf32>
    %c0_3 = arith.constant 0 : index
    %c0_4 = arith.constant 0 : index
    %3 = vector.load %arg3[%c0_3, %c0_4] : memref<1x128xf32, #tpu.memory_space<vmem>>, vector<1x128xf32>
    %4 = vector.broadcast %3 : vector<1x128xf32> to vector<16x128xf32>
    %5 = arith.addf %2, %4 : vector<16x128xf32>
    %cst_5 = arith.constant 0.000000e+00 : f32
    %6 = vector.broadcast %cst_5 : f32 to vector<16x128xf32>
    %7 = arith.maximumf %5, %6 : vector<16x128xf32>
    %8 = arith.truncf %7 : vector<16x128xf32> to vector<16x128xbf16>
    %c0_6 = arith.constant 0 : index
    %c0_7 = arith.constant 0 : index
    %9 = vector.load %arg4[%c0_6, %c0_7] : memref<128x128xbf16, #tpu.memory_space<vmem>>, vector<128x128xbf16>
    %cst_8 = arith.constant dense<0.000000e+00> : vector<16x128xf32>
    %10 = tpu.matmul %8, %9, %cst_8 {dimension_numbers = #tpu.dot_dimension_numbers<[1], [0], [0], [1], [0, 0, 1, 1], [], []>} : vector<16x128xbf16>, vector<128x128xbf16>, vector<16x128xf32> -> vector<16x128xf32>
    %c0_9 = arith.constant 0 : index
    %c0_10 = arith.constant 0 : index
    %11 = vector.load %arg5[%c0_9, %c0_10] : memref<1x128xf32, #tpu.memory_space<vmem>>, vector<1x128xf32>
    %12 = vector.broadcast %11 : vector<1x128xf32> to vector<16x128xf32>
    %13 = arith.addf %10, %12 : vector<16x128xf32>
    %cst_11 = arith.constant dense<0xFF800000> : vector<16xf32>
    %14 = vector.multi_reduction <maximumf>, %13, %cst_11 [1] : vector<16x128xf32> to vector<16xf32>
    %15 = vector.shape_cast %14 : vector<16xf32> to vector<16x1xf32>
    %16 = vector.broadcast %15 : vector<16x1xf32> to vector<16x128xf32>
    %17 = arith.subf %13, %16 : vector<16x128xf32>
    %18 = math.exp %17 : vector<16x128xf32>
    %cst_12 = arith.constant dense<0.000000e+00> : vector<16xf32>
    %19 = vector.multi_reduction <add>, %18, %cst_12 [1] : vector<16x128xf32> to vector<16xf32>
    %20 = vector.shape_cast %19 : vector<16xf32> to vector<16x1xf32>
    %cst_13 = arith.constant 1.000000e+00 : f32
    %21 = vector.broadcast %cst_13 : f32 to vector<16x1xf32>
    %22 = arith.divf %21, %20 : vector<16x1xf32>
    %23 = vector.broadcast %22 : vector<16x1xf32> to vector<16x128xf32>
    %24 = arith.mulf %18, %23 : vector<16x128xf32>
    %25 = arith.truncf %24 : vector<16x128xf32> to vector<16x128xbf16>
    %c0_14 = arith.constant 0 : index
    %c0_15 = arith.constant 0 : index
    %26 = vector.load %arg6[%c0_14, %c0_15] : memref<16x128xbf16, #tpu.memory_space<vmem>>, vector<16x128xbf16>
    tpu.vector_store %arg6[%c0_14, %c0_15], %25 {strides = array<i32>} : memref<16x128xbf16, #tpu.memory_space<vmem>>, vector<16x128xbf16>,
    return
  }
  func.func @transform_0(%arg0: i32) -> (i32, i32) {
    %c0_i32 = arith.constant 0 : i32
    %c0_i32_0 = arith.constant 0 : i32
    return %arg0, %c0_i32 : i32, i32
  }
  func.func @transform_1(%arg0: i32) -> (i32, i32) {
    %c0_i32 = arith.constant 0 : i32
    %c0_i32_0 = arith.constant 0 : i32
    %c0_i32_1 = arith.constant 0 : i32
    return %c0_i32, %c0_i32_0 : i32, i32
  }
  func.func @transform_2(%arg0: i32) -> (i32, i32) {
    %c0_i32 = arith.constant 0 : i32
    %c0_i32_0 = arith.constant 0 : i32
    %c0_i32_1 = arith.constant 0 : i32
    return %c0_i32, %c0_i32_0 : i32, i32
  }
  func.func @transform_3(%arg0: i32) -> (i32, i32) {
    %c0_i32 = arith.constant 0 : i32
    %c0_i32_0 = arith.constant 0 : i32
    %c0_i32_1 = arith.constant 0 : i32
    return %c0_i32, %c0_i32_0 : i32, i32
  }
  func.func @transform_4(%arg0: i32) -> (i32, i32) {
    %c0_i32 = arith.constant 0 : i32
    %c0_i32_0 = arith.constant 0 : i32
    %c0_i32_1 = arith.constant 0 : i32
    return %c0_i32, %c0_i32_0 : i32, i32
  }
  func.func @transform_5(%arg0: i32) -> (i32, i32) {
    %c0_i32 = arith.constant 0 : i32
    %c0_i32_0 = arith.constant 0 : i32
    return %arg0, %c0_i32 : i32, i32
  }
}

module attributes {stable_mosaic.version = 11 : i64} {
  func.func @latent_classifier_kernel(%arg0: i32, %arg1: memref<16x128xbf16, #tpu.memory_space<vmem>>, %arg2: memref<128x128xbf16, #tpu.memory_space<vmem>>, %arg3: memref<1x128xf32, #tpu.memory_space<vmem>>, %arg4: memref<128x128xbf16, #tpu.memory_space<vmem>>, %arg5: memref<1x128xf32, #tpu.memory_space<vmem>>, %arg6: memref<16x128xbf16, #tpu.memory_space<vmem>>) attributes {dimension_semantics = [#tpu.dimension_semantics<parallel>], iteration_bounds = array<i64: 1>, scalar_prefetch = 0 : i64, scratch_operands = 0 : i64, tpu.core_type = #tpu.core_type<tc>, window_params = [{transform_indices = @transform_0, window_bounds = array<i64: 16, 128>}, {pipeline_mode = #tpu.pipeline_mode<synchronous>, transform_indices = @transform_1, window_bounds = array<i64: 128, 128>}, {pipeline_mode = #tpu.pipeline_mode<synchronous>, transform_indices = @transform_2, window_bounds = array<i64: 1, 128>}, {pipeline_mode = #tpu.pipeline_mode<synchronous>, transform_indices = @transform_3, window_bounds = array<i64: 128, 128>}, {pipeline_mode = #tpu.pipeline_mode<synchronous>, transform_indices = @transform_4, window_bounds = array<i64: 1, 128>}, {transform_indices = @transform_5, window_bounds = array<i64: 16, 128>}]} {
    %c0 = arith.constant 0 : index
    %c0_0 = arith.constant 0 : index
    %0 = vector.load %arg1[%c0, %c0_0] : memref<16x128xbf16, #tpu.memory_space<vmem>>, vector<16x128xbf16>
    %c0_1 = arith.constant 0 : index
    %c0_2 = arith.constant 0 : index
    %1 = vector.load %arg2[%c0_1, %c0_2] : memref<128x128xbf16, #tpu.memory_space<vmem>>, vector<128x128xbf16>
    %cst = arith.constant dense<0.000000e+00> : vector<16x128xf32>
    %2 = tpu.matmul %0, %1, %cst {dimension_numbers = #tpu.dot_dimension_numbers<[1], [0], [0], [1], [0, 0, 1, 1], [], []>} : vector<16x128xbf16>, vector<128x128xbf16>, vector<16x128xf32> -> vector<16x128xf32>
    %c0_3 = arith.constant 0 : index
    %c0_4 = arith.constant 0 : index
    %3 = vector.load %arg3[%c0_3, %c0_4] : memref<1x128xf32, #tpu.memory_space<vmem>>, vector<1x128xf32>
    %4 = vector.broadcast %3 : vector<1x128xf32> to vector<16x128xf32>
    %5 = arith.addf %2, %4 : vector<16x128xf32>
    %cst_5 = arith.constant 0.000000e+00 : f32
    %6 = vector.broadcast %cst_5 : f32 to vector<16x128xf32>
    %7 = arith.maximumf %5, %6 : vector<16x128xf32>
    %8 = arith.truncf %7 : vector<16x128xf32> to vector<16x128xbf16>
    %c0_6 = arith.constant 0 : index
    %c0_7 = arith.constant 0 : index
    %9 = vector.load %arg4[%c0_6, %c0_7] : memref<128x128xbf16, #tpu.memory_space<vmem>>, vector<128x128xbf16>
    %cst_8 = arith.constant dense<0.000000e+00> : vector<16x128xf32>
    %10 = tpu.matmul %8, %9, %cst_8 {dimension_numbers = #tpu.dot_dimension_numbers<[1], [0], [0], [1], [0, 0, 1, 1], [], []>} : vector<16x128xbf16>, vector<128x128xbf16>, vector<16x128xf32> -> vector<16x128xf32>
    %c0_9 = arith.constant 0 : index
    %c0_10 = arith.constant 0 : index
    %11 = vector.load %arg5[%c0_9, %c0_10] : memref<1x128xf32, #tpu.memory_space<vmem>>, vector<1x128xf32>
    %12 = vector.broadcast %11 : vector<1x128xf32> to vector<16x128xf32>
    %13 = arith.addf %10, %12 : vector<16x128xf32>
    %cst_11 = arith.constant dense<0xFF800000> : vector<16xf32>
    %14 = vector.multi_reduction <maximumf>, %13, %cst_11 [1] : vector<16x128xf32> to vector<16xf32>
    %15 = vector.shape_cast %14 : vector<16xf32> to vector<16x1xf32>
    %16 = vector.broadcast %15 : vector<16x1xf32> to vector<16x128xf32>
    %17 = arith.subf %13, %16 : vector<16x128xf32>
    %18 = math.exp %17 : vector<16x128xf32>
    %cst_12 = arith.constant dense<0.000000e+00> : vector<16xf32>
    %19 = vector.multi_reduction <add>, %18, %cst_12 [1] : vector<16x128xf32> to vector<16xf32>
    %20 = vector.shape_cast %19 : vector<16xf32> to vector<16x1xf32>
    %cst_13 = arith.constant 1.000000e+00 : f32
    %21 = vector.broadcast %cst_13 : f32 to vector<16x1xf32>
    %22 = arith.divf %21, %20 : vector<16x1xf32>
    %23 = vector.broadcast %22 : vector<16x1xf32> to vector<16x128xf32>
    %24 = arith.mulf %18, %23 : vector<16x128xf32>
    %25 = arith.truncf %24 : vector<16x128xf32> to vector<16x128xbf16>
    %c0_14 = arith.constant 0 : index
    %c0_15 = arith.constant 0 : index
    %26 = vector.load %arg6[%c0_14, %c0_15] : memref<16x128xbf16, #tpu.memory_space<vmem>>, vector<16x128xbf16>
    tpu.vector_store %arg6[%c0_14, %c0_15], %25 {strides = array<i32>} : memref<16x128xbf16, #tpu.memory_space<vmem>>, vector<16x128xbf16>,
    return
  }
  func.func @transform_0(%arg0: i32) -> (i32, i32) {
    %c0_i32 = arith.constant 0 : i32
    %c0_i32_0 = arith.constant 0 : i32
    return %arg0, %c0_i32 : i32, i32
  }
  func.func @transform_1(%arg0: i32) -> (i32, i32) {
    %c0_i32 = arith.constant 0 : i32
    %c0_i32_0 = arith.constant 0 : i32
    %c0_i32_1 = arith.constant 0 : i32
    return %c0_i32, %c0_i32_0 : i32, i32
  }
  func.func @transform_2(%arg0: i32) -> (i32, i32) {
    %c0_i32 = arith.constant 0 : i32
    %c0_i32_0 = arith.constant 0 : i32
    %c0_i32_1 = arith.constant 0 : i32
    return %c0_i32, %c0_i32_0 : i32, i32
  }
  func.func @transform_3(%arg0: i32) -> (i32, i32) {
    %c0_i32 = arith.constant 0 : i32
    %c0_i32_0 = arith.constant 0 : i32
    %c0_i32_1 = arith.constant 0 : i32
    return %c0_i32, %c0_i32_0 : i32, i32
  }
  func.func @transform_4(%arg0: i32) -> (i32, i32) {
    %c0_i32 = arith.constant 0 : i32
    %c0_i32_0 = arith.constant 0 : i32
    %c0_i32_1 = arith.constant 0 : i32
    return %c0_i32, %c0_i32_0 : i32, i32
  }
  func.func @transform_5(%arg0: i32) -> (i32, i32) {
    %c0_i32 = arith.constant 0 : i32
    %c0_i32_0 = arith.constant 0 : i32
    return %arg0, %c0_i32 : i32, i32
  }
}

</mosaic_0001>

<llo_original>
// kernel: tpu_custom_call.1
$region0: #{tpu_custom_call.1}
  #allocation0 [shape = 'u32[]', space=smem, size = 0x4, offset = 0x4, fixed_abs, tag = 'smem constant byte address 0x4 - core index']
  #allocation1 [shape = 'u32[144,128]{1,0:T(1,128)}', space=vmem, size = 0x12000, scoped, tag = 'internal scratch']
  %s0 = inlined_call_operand.hbm [shape: bf16[16,128], index: 0, kind: input, shape index: {}]
  %s1 = inlined_call_operand.hbm [shape: bf16[128,128], index: 1, kind: input, shape index: {}]
  %s2 = inlined_call_operand.vmem [shape: f32[1,128], index: 2, kind: input, shape index: {}]
  %s3 = inlined_call_operand.hbm [shape: bf16[128,128], index: 3, kind: input, shape index: {}]
  %s4 = inlined_call_operand.vmem [shape: f32[1,128], index: 4, kind: input, shape index: {}]
  %s5 = inlined_call_operand.hbm [shape: bf16[16,128], index: 5, kind: output, shape index: {}]
  %s6 = sld [smem:[#allocation0]]
  $region42: #{tpu_custom_call.1} parent=0
    _
  %s8 = ssub.s32 1, %s6
  %s9 = scalar_select 0, %s8, %s6
  $region1: #{tpu_custom_call.1} parent=0
    #allocation2 [shape = 'u8[4096]{0}', space=vmem, size = 0x1000, scoped, tag = 'input window, operand 0, single buffered']
    #allocation3 [shape = 's32[1]{0}', space=sflag, size = 0x4, scoped, tag = 'scoped memory for tpu_custom_call.1']
    #allocation4 [shape = 's32[1]{0}', space=sflag, size = 0x4, scoped, tag = 'scoped memory for tpu_custom_call.1']
    #allocation5 [shape = 'u8[32768]{0}', space=vmem, size = 0x8000, scoped, tag = 'input window, operand 1, single buffered']
    #allocation6 [shape = 's32[1]{0}', space=sflag, size = 0x4, scoped, tag = 'scoped memory for tpu_custom_call.1']
    #allocation7 [shape = 'u8[32768]{0}', space=vmem, size = 0x8000, scoped, tag = 'input window, operand 3, single buffered']
    #allocation8 [shape = 'u8[4096]{0}', space=vmem, size = 0x1000, scoped, tag = 'output window, operand 0, single buffered']
    %10 = vsyncpa [#allocation3], 0
    %11 = vsyncpa [#allocation6], 0
    %12 = vsyncpa [#allocation4], 0
    // Predicated region
    $region2: #{tpu_custom_call.1} parent=1 // pred_check
      _
    $region3: #{tpu_custom_call.1} parent=1 // pred_check_branch
      %14 = sbr.rel (0) target = $region5
    $region4: #{tpu_custom_call.1} parent=1 // pred_region
      %s16 = ssub.s32 128, 128
      %17 = vsyncadd [#allocation3], %s16
      %s18 = sshll.u32 [#allocation2], 4
      %s19 = int_to_ptr.vmem [resolvable:$true] %s18
      %24 = dma.hbm_to_vmem [thread:$0]  %s0, 128, %s19, [#allocation3], 64, 64, 4
    $region5: #{tpu_custom_call.1} parent=1 // pred_fallthru
      _
    // Predicated region
    $region6: #{tpu_custom_call.1} parent=1 // pred_check
      _
    $region7: #{tpu_custom_call.1} parent=1 // pred_check_branch
      %26 = sbr.rel (0) target = $region9
    $region8: #{tpu_custom_call.1} parent=1 // pred_region
      %s28 = ssub.s32 1024, 1024
      %29 = vsyncadd [#allocation6], %s28
      %s30 = sshll.u32 [#allocation5], 4
      %s31 = int_to_ptr.vmem [resolvable:$true] %s30
      %36 = dma.hbm_to_vmem [thread:$0]  %s1, 1024, %s31, [#allocation6], 64, 64, 4
    $region9: #{tpu_custom_call.1} parent=1 // pred_fallthru
      _
    // Predicated region
    $region10: #{tpu_custom_call.1} parent=1 // pred_check
      _
    $region11: #{tpu_custom_call.1} parent=1 // pred_check_branch
      %38 = sbr.rel (0) target = $region13
    $region12: #{tpu_custom_call.1} parent=1 // pred_region
      _
    $region13: #{tpu_custom_call.1} parent=1 // pred_fallthru
      _
    // Predicated region
    $region14: #{tpu_custom_call.1} parent=1 // pred_check
      _
    $region15: #{tpu_custom_call.1} parent=1 // pred_check_branch
      %40 = sbr.rel (0) target = $region17
    $region16: #{tpu_custom_call.1} parent=1 // pred_region
      %s42 = ssub.s32 1024, 1024
      %43 = vsyncadd [#allocation6], %s42
      %s44 = sshll.u32 [#allocation7], 4
      %s45 = int_to_ptr.vmem [resolvable:$true] %s44
      %50 = dma.hbm_to_vmem [thread:$0]  %s3, 1024, %s45, [#allocation6], 64, 64, 4
    $region17: #{tpu_custom_call.1} parent=1 // pred_fallthru
      _
    // Predicated region
    $region18: #{tpu_custom_call.1} parent=1 // pred_check
      _
    $region19: #{tpu_custom_call.1} parent=1 // pred_check_branch
      %52 = sbr.rel (0) target = $region21
    $region20: #{tpu_custom_call.1} parent=1 // pred_region
      _
    $region21: #{tpu_custom_call.1} parent=1 // pred_fallthru
      _
    // Predicated region
    $region22: #{tpu_custom_call.1} parent=1 // pred_check
      _
    $region23: #{tpu_custom_call.1} parent=1 // pred_check_branch
      %54 = sbr.rel (0) target = $region25
    $region24: #{tpu_custom_call.1} parent=1 // pred_region
      %55 = dma.done [#allocation3], 128
    $region25: #{tpu_custom_call.1} parent=1 // pred_fallthru
      _
    // Predicated region
    $region26: #{tpu_custom_call.1} parent=1 // pred_check
      _
    $region27: #{tpu_custom_call.1} parent=1 // pred_check_branch
      %57 = sbr.rel (0) target = $region29
    $region28: #{tpu_custom_call.1} parent=1 // pred_region
      %58 = dma.done [#allocation6], 1024
    $region29: #{tpu_custom_call.1} parent=1 // pred_fallthru
      _
    // Predicated region
    $region30: #{tpu_custom_call.1} parent=1 // pred_check
      _
    $region31: #{tpu_custom_call.1} parent=1 // pred_check_branch
      %60 = sbr.rel (0) target = $region33
    $region32: #{tpu_custom_call.1} parent=1 // pred_region
      %61 = dma.done [#allocation6], 1024
    $region33: #{tpu_custom_call.1} parent=1 // pred_fallthru
      _
    %v63 = vld [vmem:[#allocation2] sm:$0xf]
    %v64 = vld [vmem:[#allocation2 + $0x4] sm:$0xf]
    %v65 = vld [vmem:[#allocation5] sm:$0xf]
    %v66 = vld [vmem:[#allocation5 + $0x4] sm:$0xf]
    %v67 = vld [vmem:[#allocation5 + $0x8] sm:$0xf]
    %v68 = vld [vmem:[#allocation5 + $0xc] sm:$0xf]
    %v69 = vld [vmem:[#allocation5 + $0x10] sm:$0xf]
    %v70 = vld [vmem:[#allocation5 + $0x14] sm:$0xf]
    %v71 = vld [vmem:[#allocation5 + $0x18] sm:$0xf]
    %v72 = vld [vmem:[#allocation5 + $0x1c] sm:$0xf]
    %v73 = vld [vmem:[#allocation5 + $0x20] sm:$0xf]
    %v74 = vld [vmem:[#allocation5 + $0x24] sm:$0xf]
    %v75 = vld [vmem:[#allocation5 + $0x28] sm:$0xf]
    %v76 = vld [vmem:[#allocation5 + $0x2c] sm:$0xf]
    %v77 = vld [vmem:[#allocation5 + $0x30] sm:$0xf]
    %v78 = vld [vmem:[#allocation5 + $0x34] sm:$0xf]
    %v79 = vld [vmem:[#allocation5 + $0x38] sm:$0xf]
    %v80 = vld [vmem:[#allocation5 + $0x3c] sm:$0xf]
    %v81 = vld [vmem:[%s2] sm:$0x1]
    %v83 = vlaneseq
    %v84 = vshrl.u32 %v83, 7
    %v85 = vsub.s32 0, %v84
    %v86 = vrot.slane %v81, %v85
    %v90 = vunpack.c.l.b16 %v63
    %v91 = vunpack.c.l.b16 %v64
    %v92 = vpack.c.b16 %v91, %v90
    %v110 = vunpack.c.l.b16 %v65
    %v111 = vunpack.c.l.b16 %v66
    %v112 = vunpack.c.l.b16 %v67
    %v113 = vunpack.c.l.b16 %v68
    %v114 = vunpack.c.l.b16 %v69
    %v115 = vunpack.c.l.b16 %v70
    %v116 = vunpack.c.l.b16 %v71
    %v117 = vunpack.c.l.b16 %v72
    %v118 = vunpack.c.l.b16 %v73
    %v119 = vunpack.c.l.b16 %v74
    %v120 = vunpack.c.l.b16 %v75
    %v121 = vunpack.c.l.b16 %v76
    %v122 = vunpack.c.l.b16 %v77
    %v123 = vunpack.c.l.b16 %v78
    %v124 = vunpack.c.l.b16 %v79
    %v125 = vunpack.c.l.b16 %v80
    %v126 = vpack.c.b16 %v111, %v110
    %v127 = vpack.c.b16 %v113, %v112
    %v128 = vpack.c.b16 %v115, %v114
    %v129 = vpack.c.b16 %v117, %v116
    %v130 = vpack.c.b16 %v119, %v118
    %v131 = vpack.c.b16 %v121, %v120
    %v132 = vpack.c.b16 %v123, %v122
    %v133 = vpack.c.b16 %v125, %v124
    %142 = vmatprep.subr.bf16.mxu0 0
    %143 = vmatpush1.bf16.msra.mxu0 %v126
    %144 = vmatprep.subr.bf16.mxu0 0
    %145 = vmatpush1.bf16.msra.mxu0 %v127
    %146 = vmatprep.subr.bf16.mxu0 0
    %147 = vmatpush1.bf16.msra.mxu0 %v128
    %148 = vmatprep.subr.bf16.mxu0 0
    %149 = vmatpush1.bf16.msra.mxu0 %v129
    %150 = vmatprep.subr.bf16.mxu0 0
    %151 = vmatpush1.bf16.msra.mxu0 %v130
    %152 = vmatprep.subr.bf16.mxu0 0
    %153 = vmatpush1.bf16.msra.mxu0 %v131
    %154 = vmatprep.subr.bf16.mxu0 0
    %155 = vmatpush1.bf16.msra.mxu0 %v132
    %156 = vmatprep.subr.bf16.mxu0 0
    %157 = vmatpush1.bf16.msra.mxu0 %v133
    %158 = vmatprep.subr.bf16.mxu0 0
    %159 = vmatpush1.bf16.msra.mxu0 0
    %160 = vmatprep.subr.bf16.mxu0 0
    %161 = vmatpush1.bf16.msra.mxu0 0
    %162 = vmatprep.subr.bf16.mxu0 0
    %163 = vmatpush1.bf16.msra.mxu0 0
    %164 = vmatprep.subr.bf16.mxu0 0
    %165 = vmatpush1.bf16.msra.mxu0 0
    %166 = vmatprep.subr.bf16.mxu0 0
    %167 = vmatpush1.bf16.msra.mxu0 0
    %168 = vmatprep.subr.bf16.mxu0 0
    %169 = vmatpush1.bf16.msra.mxu0 0
    %170 = vmatprep.subr.bf16.mxu0 0
    %171 = vmatpush1.bf16.msra.mxu0 0
    %172 = vmatprep.subr.bf16.mxu0 0
    %173 = vmatpush1.bf16.msra.mxu0 0
    %174 = vmatprep.mubr.bf16.mxu0 0
    %175 = vmatmul.mubr.bf16.gmra.mrb[0].mxu0 %v92
    %v176 = vpop.f32.mrb[0].mxu0
    %v177 = vadd.f32 %v86, %v176
    %v178 = vpop.f32.mrb[0].mxu0
    %v179 = vpop.f32.mrb[0].mxu0
    %v180 = vadd.f32 %v86, %v179
    %v181 = vpop.f32.mrb[0].mxu0
    %182 = vdwg.mxu0
    %v183 = vmax.f32 %v177, 0.0
    %v184 = vmax.f32 %v180, 0.0
    %v185 = vpack.c.bf16 %v184, %v183
    %v186 = vld [vmem:[#allocation7] sm:$0xf]
    %v187 = vld [vmem:[#allocation7 + $0x4] sm:$0xf]
    %v188 = vld [vmem:[#allocation7 + $0x8] sm:$0xf]
    %v189 = vld [vmem:[#allocation7 + $0xc] sm:$0xf]
    %v190 = vld [vmem:[#allocation7 + $0x10] sm:$0xf]
    %v191 = vld [vmem:[#allocation7 + $0x14] sm:$0xf]
    %v192 = vld [vmem:[#allocation7 + $0x18] sm:$0xf]
    %v193 = vld [vmem:[#allocation7 + $0x1c] sm:$0xf]
    %v194 = vld [vmem:[#allocation7 + $0x20] sm:$0xf]
    %v195 = vld [vmem:[#allocation7 + $0x24] sm:$0xf]
    %v196 = vld [vmem:[#allocation7 + $0x28] sm:$0xf]
    %v197 = vld [vmem:[#allocation7 + $0x2c] sm:$0xf]
    %v198 = vld [vmem:[#allocation7 + $0x30] sm:$0xf]
    %v199 = vld [vmem:[#allocation7 + $0x34] sm:$0xf]
    %v200 = vld [vmem:[#allocation7 + $0x38] sm:$0xf]
    %v201 = vld [vmem:[#allocation7 + $0x3c] sm:$0xf]
    %v202 = vld [vmem:[%s4] sm:$0x1]
    %v204 = vlaneseq
    %v205 = vshrl.u32 %v204, 7
    %v206 = vsub.s32 0, %v205
    %v207 = vrot.slane %v202, %v206
    %v225 = vunpack.c.l.b16 %v186
    %v226 = vunpack.c.l.b16 %v187
    %v227 = vunpack.c.l.b16 %v188
    %v228 = vunpack.c.l.b16 %v189
    %v229 = vunpack.c.l.b16 %v190
    %v230 = vunpack.c.l.b16 %v191
    %v231 = vunpack.c.l.b16 %v192
    %v232 = vunpack.c.l.b16 %v193
    %v233 = vunpack.c.l.b16 %v194
    %v234 = vunpack.c.l.b16 %v195
    %v235 = vunpack.c.l.b16 %v196
    %v236 = vunpack.c.l.b16 %v197
    %v237 = vunpack.c.l.b16 %v198
    %v238 = vunpack.c.l.b16 %v199
    %v239 = vunpack.c.l.b16 %v200
    %v240 = vunpack.c.l.b16 %v201
    %v241 = vpack.c.b16 %v226, %v225
    %v242 = vpack.c.b16 %v228, %v227
    %v243 = vpack.c.b16 %v230, %v229
    %v244 = vpack.c.b16 %v232, %v231
    %v245 = vpack.c.b16 %v234, %v233
    %v246 = vpack.c.b16 %v236, %v235
    %v247 = vpack.c.b16 %v238, %v237
    %v248 = vpack.c.b16 %v240, %v239
    %257 = vmatprep.subr.bf16.mxu0 0
    %258 = vmatpush1.bf16.msra.mxu0 %v241
    %259 = vmatprep.subr.bf16.mxu0 0
    %260 = vmatpush1.bf16.msra.mxu0 %v242
    %261 = vmatprep.subr.bf16.mxu0 0
    %262 = vmatpush1.bf16.msra.mxu0 %v243
    %263 = vmatprep.subr.bf16.mxu0 0
    %264 = vmatpush1.bf16.msra.mxu0 %v244
    %265 = vmatprep.subr.bf16.mxu0 0
    %266 = vmatpush1.bf16.msra.mxu0 %v245
    %267 = vmatprep.subr.bf16.mxu0 0
    %268 = vmatpush1.bf16.msra.mxu0 %v246
    %269 = vmatprep.subr.bf16.mxu0 0
    %270 = vmatpush1.bf16.msra.mxu0 %v247
    %271 = vmatprep.subr.bf16.mxu0 0
    %272 = vmatpush1.bf16.msra.mxu0 %v248
    %273 = vmatprep.subr.bf16.mxu0 0
    %274 = vmatpush1.bf16.msra.mxu0 0
    %275 = vmatprep.subr.bf16.mxu0 0
    %276 = vmatpush1.bf16.msra.mxu0 0
    %277 = vmatprep.subr.bf16.mxu0 0
    %278 = vmatpush1.bf16.msra.mxu0 0
    %279 = vmatprep.subr.bf16.mxu0 0
    %280 = vmatpush1.bf16.msra.mxu0 0
    %281 = vmatprep.subr.bf16.mxu0 0
    %282 = vmatpush1.bf16.msra.mxu0 0
    %283 = vmatprep.subr.bf16.mxu0 0
    %284 = vmatpush1.bf16.msra.mxu0 0
    %285 = vmatprep.subr.bf16.mxu0 0
    %286 = vmatpush1.bf16.msra.mxu0 0
    %287 = vmatprep.subr.bf16.mxu0 0
    %288 = vmatpush1.bf16.msra.mxu0 0
    %289 = vmatprep.mubr.bf16.mxu0 0
    %290 = vmatmul.mubr.bf16.gmra.mrb[0].mxu0 %v185
    %v291 = vpop.f32.mrb[0].mxu0
    %v292 = vadd.f32 %v207, %v291
    %v293 = vpop.f32.mrb[0].mxu0
    %v294 = vpop.f32.mrb[0].mxu0
    %v295 = vadd.f32 %v207, %v294
    %v296 = vpop.f32.mrb[0].mxu0
    %297 = vdwg.mxu0
    %298 = vmax.xlane.f32.xlu0 %v292
    %v299 = vpop.xlane.xlu0 %298
    %300 = vmax.xlane.f32.xlu0 %v295
    %v301 = vpop.xlane.xlu0 %300
    %v302 = vsub.f32 %v292, %v299
    %v303 = vsub.f32 %v295, %v301
    %v304 = vmul.f32 %v302, 1.442695
    %v305 = vpow.pop %v304
    %v306 = vmul.f32 %v303, 1.442695
    %v307 = vpow.pop %v306
    %308 = vadd.xlane.f32.xlu0 %v305
    %v309 = vpop.xlane.xlu0 %308
    %310 = vadd.xlane.f32.xlu0 %v307
    %v311 = vpop.xlane.xlu0 %310
    %v312 = vrcp.pop %v309
    %v313 = vmul.f32 1.0, %v312
    %v314 = vrcp.pop %v311
    %v315 = vmul.f32 1.0, %v314
    %v316 = vmul.f32 %v305, %v313
    %v317 = vmul.f32 %v307, %v315
    %v318 = vpack.c.bf16 %v317, %v316
    %v320 = vunpack.c.l.b16 %v318
    %v321 = vunpack.c.h.b16 %v318
    %v322 = vpack.c.b16 %v320, %v320
    %v323 = vpack.c.b16 %v321, %v321
    %326 = vst [vmem:[#allocation8] sm:$0xf] %v322
    %327 = vst [vmem:[#allocation8 + $0x4] sm:$0xf] %v323
    // Predicated region
    $region34: #{tpu_custom_call.1} parent=1 // pred_check
      _
    $region35: #{tpu_custom_call.1} parent=1 // pred_check_branch
      %329 = sbr.rel (0) target = $region37
    $region36: #{tpu_custom_call.1} parent=1 // pred_region
      %s331 = ssub.s32 128, 128
      %332 = vsyncadd [#allocation4], %s331
      %s333 = sshll.u32 [#allocation8], 4
      %s334 = int_to_ptr.vmem [resolvable:$true] %s333
      %339 = dma.vmem_to_hbm [thread:$0]  %s334, 128, %s5, [#allocation4], 64, 64, 4
    $region37: #{tpu_custom_call.1} parent=1 // pred_fallthru
      _
    // Predicated region
    $region38: #{tpu_custom_call.1} parent=1 // pred_check
      _
    $region39: #{tpu_custom_call.1} parent=1 // pred_check_branch
      %341 = sbr.rel (0) target = $region41
    $region40: #{tpu_custom_call.1} parent=1 // pred_region
      %342 = dma.done [#allocation4], 128
    $region41: #{tpu_custom_call.1} parent=1 // pred_fallthru
      _
    %343 = vsyncpa [#allocation3], 1
    %344 = vsyncpa [#allocation6], 1
    %345 = vsyncpa [#allocation4], 1

// kernel: tpu_custom_call.1
$region0: #{tpu_custom_call.1}
  #allocation0 [shape = 'u32[]', space=smem, size = 0x4, offset = 0x4, fixed_abs, tag = 'smem constant byte address 0x4 - core index']
  #allocation1 [shape = 'u32[144,128]{1,0:T(1,128)}', space=vmem, size = 0x12000, scoped, tag = 'internal scratch']
  %s0 = inlined_call_operand.hbm [shape: bf16[16,128], index: 0, kind: input, shape index: {}]
  %s1 = inlined_call_operand.hbm [shape: bf16[128,128], index: 1, kind: input, shape index: {}]
  %s2 = inlined_call_operand.vmem [shape: f32[1,128], index: 2, kind: input, shape index: {}]
  %s3 = inlined_call_operand.hbm [shape: bf16[128,128], index: 3, kind: input, shape index: {}]
  %s4 = inlined_call_operand.vmem [shape: f32[1,128], index: 4, kind: input, shape index: {}]
  %s5 = inlined_call_operand.hbm [shape: bf16[16,128], index: 5, kind: output, shape index: {}]
  %s6 = sld [smem:[#allocation0]]
  $region42: #{tpu_custom_call.1} parent=0
    _
  %s8 = ssub.s32 1, %s6
  %s9 = scalar_select 0, %s8, %s6
  $region1: #{tpu_custom_call.1} parent=0
    #allocation2 [shape = 'u8[4096]{0}', space=vmem, size = 0x1000, scoped, tag = 'input window, operand 0, single buffered']
    #allocation3 [shape = 's32[1]{0}', space=sflag, size = 0x4, scoped, tag = 'scoped memory for tpu_custom_call.1']
    #allocation4 [shape = 's32[1]{0}', space=sflag, size = 0x4, scoped, tag = 'scoped memory for tpu_custom_call.1']
    #allocation5 [shape = 'u8[32768]{0}', space=vmem, size = 0x8000, scoped, tag = 'input window, operand 1, single buffered']
    #allocation6 [shape = 's32[1]{0}', space=sflag, size = 0x4, scoped, tag = 'scoped memory for tpu_custom_call.1']
    #allocation7 [shape = 'u8[32768]{0}', space=vmem, size = 0x8000, scoped, tag = 'input window, operand 3, single buffered']
    #allocation8 [shape = 'u8[4096]{0}', space=vmem, size = 0x1000, scoped, tag = 'output window, operand 0, single buffered']
    %10 = vsyncpa [#allocation3], 0
    %11 = vsyncpa [#allocation6], 0
    %12 = vsyncpa [#allocation4], 0
    // Predicated region
    $region2: #{tpu_custom_call.1} parent=1 // pred_check
      _
    $region3: #{tpu_custom_call.1} parent=1 // pred_check_branch
      %14 = sbr.rel (0) target = $region5
    $region4: #{tpu_custom_call.1} parent=1 // pred_region
      %s16 = ssub.s32 128, 128
      %17 = vsyncadd [#allocation3], %s16
      %s18 = sshll.u32 [#allocation2], 4
      %s19 = int_to_ptr.vmem [resolvable:$true] %s18
      %24 = dma.hbm_to_vmem [thread:$0]  %s0, 128, %s19, [#allocation3], 64, 64, 4
    $region5: #{tpu_custom_call.1} parent=1 // pred_fallthru
      _
    // Predicated region
    $region6: #{tpu_custom_call.1} parent=1 // pred_check
      _
    $region7: #{tpu_custom_call.1} parent=1 // pred_check_branch
      %26 = sbr.rel (0) target = $region9
    $region8: #{tpu_custom_call.1} parent=1 // pred_region
      %s28 = ssub.s32 1024, 1024
      %29 = vsyncadd [#allocation6], %s28
      %s30 = sshll.u32 [#allocation5], 4
      %s31 = int_to_ptr.vmem [resolvable:$true] %s30
      %36 = dma.hbm_to_vmem [thread:$0]  %s1, 1024, %s31, [#allocation6], 64, 64, 4
    $region9: #{tpu_custom_call.1} parent=1 // pred_fallthru
      _
    // Predicated region
    $region10: #{tpu_custom_call.1} parent=1 // pred_check
      _
    $region11: #{tpu_custom_call.1} parent=1 // pred_check_branch
      %38 = sbr.rel (0) target = $region13
    $region12: #{tpu_custom_call.1} parent=1 // pred_region
      _
    $region13: #{tpu_custom_call.1} parent=1 // pred_fallthru
      _
    // Predicated region
    $region14: #{tpu_custom_call.1} parent=1 // pred_check
      _
    $region15: #{tpu_custom_call.1} parent=1 // pred_check_branch
      %40 = sbr.rel (0) target = $region17
    $region16: #{tpu_custom_call.1} parent=1 // pred_region
      %s42 = ssub.s32 1024, 1024
      %43 = vsyncadd [#allocation6], %s42
      %s44 = sshll.u32 [#allocation7], 4
      %s45 = int_to_ptr.vmem [resolvable:$true] %s44
      %50 = dma.hbm_to_vmem [thread:$0]  %s3, 1024, %s45, [#allocation6], 64, 64, 4
    $region17: #{tpu_custom_call.1} parent=1 // pred_fallthru
      _
    // Predicated region
    $region18: #{tpu_custom_call.1} parent=1 // pred_check
      _
    $region19: #{tpu_custom_call.1} parent=1 // pred_check_branch
      %52 = sbr.rel (0) target = $region21
    $region20: #{tpu_custom_call.1} parent=1 // pred_region
      _
    $region21: #{tpu_custom_call.1} parent=1 // pred_fallthru
      _
    // Predicated region
    $region22: #{tpu_custom_call.1} parent=1 // pred_check
      _
    $region23: #{tpu_custom_call.1} parent=1 // pred_check_branch
      %54 = sbr.rel (0) target = $region25
    $region24: #{tpu_custom_call.1} parent=1 // pred_region
      %55 = dma.done [#allocation3], 128
    $region25: #{tpu_custom_call.1} parent=1 // pred_fallthru
      _
    // Predicated region
    $region26: #{tpu_custom_call.1} parent=1 // pred_check
      _
    $region27: #{tpu_custom_call.1} parent=1 // pred_check_branch
      %57 = sbr.rel (0) target = $region29
    $region28: #{tpu_custom_call.1} parent=1 // pred_region
      %58 = dma.done [#allocation6], 1024
    $region29: #{tpu_custom_call.1} parent=1 // pred_fallthru
      _
    // Predicated region
    $region30: #{tpu_custom_call.1} parent=1 // pred_check
      _
    $region31: #{tpu_custom_call.1} parent=1 // pred_check_branch
      %60 = sbr.rel (0) target = $region33
    $region32: #{tpu_custom_call.1} parent=1 // pred_region
      %61 = dma.done [#allocation6], 1024
    $region33: #{tpu_custom_call.1} parent=1 // pred_fallthru
      _
    %v63 = vld [vmem:[#allocation2] sm:$0xf]
    %v64 = vld [vmem:[#allocation2 + $0x4] sm:$0xf]
    %v65 = vld [vmem:[#allocation5] sm:$0xf]
    %v66 = vld [vmem:[#allocation5 + $0x4] sm:$0xf]
    %v67 = vld [vmem:[#allocation5 + $0x8] sm:$0xf]
    %v68 = vld [vmem:[#allocation5 + $0xc] sm:$0xf]
    %v69 = vld [vmem:[#allocation5 + $0x10] sm:$0xf]
    %v70 = vld [vmem:[#allocation5 + $0x14] sm:$0xf]
    %v71 = vld [vmem:[#allocation5 + $0x18] sm:$0xf]
    %v72 = vld [vmem:[#allocation5 + $0x1c] sm:$0xf]
    %v73 = vld [vmem:[#allocation5 + $0x20] sm:$0xf]
    %v74 = vld [vmem:[#allocation5 + $0x24] sm:$0xf]
    %v75 = vld [vmem:[#allocation5 + $0x28] sm:$0xf]
    %v76 = vld [vmem:[#allocation5 + $0x2c] sm:$0xf]
    %v77 = vld [vmem:[#allocation5 + $0x30] sm:$0xf]
    %v78 = vld [vmem:[#allocation5 + $0x34] sm:$0xf]
    %v79 = vld [vmem:[#allocation5 + $0x38] sm:$0xf]
    %v80 = vld [vmem:[#allocation5 + $0x3c] sm:$0xf]
    %v81 = vld [vmem:[%s2] sm:$0x1]
    %v83 = vlaneseq
    %v84 = vshrl.u32 %v83, 7
    %v85 = vsub.s32 0, %v84
    %v86 = vrot.slane %v81, %v85
    %v90 = vunpack.c.l.b16 %v63
    %v91 = vunpack.c.l.b16 %v64
    %v92 = vpack.c.b16 %v91, %v90
    %v110 = vunpack.c.l.b16 %v65
    %v111 = vunpack.c.l.b16 %v66
    %v112 = vunpack.c.l.b16 %v67
    %v113 = vunpack.c.l.b16 %v68
    %v114 = vunpack.c.l.b16 %v69
    %v115 = vunpack.c.l.b16 %v70
    %v116 = vunpack.c.l.b16 %v71
    %v117 = vunpack.c.l.b16 %v72
    %v118 = vunpack.c.l.b16 %v73
    %v119 = vunpack.c.l.b16 %v74
    %v120 = vunpack.c.l.b16 %v75
    %v121 = vunpack.c.l.b16 %v76
    %v122 = vunpack.c.l.b16 %v77
    %v123 = vunpack.c.l.b16 %v78
    %v124 = vunpack.c.l.b16 %v79
    %v125 = vunpack.c.l.b16 %v80
    %v126 = vpack.c.b16 %v111, %v110
    %v127 = vpack.c.b16 %v113, %v112
    %v128 = vpack.c.b16 %v115, %v114
    %v129 = vpack.c.b16 %v117, %v116
    %v130 = vpack.c.b16 %v119, %v118
    %v131 = vpack.c.b16 %v121, %v120
    %v132 = vpack.c.b16 %v123, %v122
    %v133 = vpack.c.b16 %v125, %v124
    %142 = vmatprep.subr.bf16.mxu0 0
    %143 = vmatpush1.bf16.msra.mxu0 %v126
    %144 = vmatprep.subr.bf16.mxu0 0
    %145 = vmatpush1.bf16.msra.mxu0 %v127
    %146 = vmatprep.subr.bf16.mxu0 0
    %147 = vmatpush1.bf16.msra.mxu0 %v128
    %148 = vmatprep.subr.bf16.mxu0 0
    %149 = vmatpush1.bf16.msra.mxu0 %v129
    %150 = vmatprep.subr.bf16.mxu0 0
    %151 = vmatpush1.bf16.msra.mxu0 %v130
    %152 = vmatprep.subr.bf16.mxu0 0
    %153 = vmatpush1.bf16.msra.mxu0 %v131
    %154 = vmatprep.subr.bf16.mxu0 0
    %155 = vmatpush1.bf16.msra.mxu0 %v132
    %156 = vmatprep.subr.bf16.mxu0 0
    %157 = vmatpush1.bf16.msra.mxu0 %v133
    %158 = vmatprep.subr.bf16.mxu0 0
    %159 = vmatpush1.bf16.msra.mxu0 0
    %160 = vmatprep.subr.bf16.mxu0 0
    %161 = vmatpush1.bf16.msra.mxu0 0
    %162 = vmatprep.subr.bf16.mxu0 0
    %163 = vmatpush1.bf16.msra.mxu0 0
    %164 = vmatprep.subr.bf16.mxu0 0
    %165 = vmatpush1.bf16.msra.mxu0 0
    %166 = vmatprep.subr.bf16.mxu0 0
    %167 = vmatpush1.bf16.msra.mxu0 0
    %168 = vmatprep.subr.bf16.mxu0 0
    %169 = vmatpush1.bf16.msra.mxu0 0
    %170 = vmatprep.subr.bf16.mxu0 0
    %171 = vmatpush1.bf16.msra.mxu0 0
    %172 = vmatprep.subr.bf16.mxu0 0
    %173 = vmatpush1.bf16.msra.mxu0 0
    %174 = vmatprep.mubr.bf16.mxu0 0
    %175 = vmatmul.mubr.bf16.gmra.mrb[0].mxu0 %v92
    %v176 = vpop.f32.mrb[0].mxu0
    %v177 = vadd.f32 %v86, %v176
    %v178 = vpop.f32.mrb[0].mxu0
    %v179 = vpop.f32.mrb[0].mxu0
    %v180 = vadd.f32 %v86, %v179
    %v181 = vpop.f32.mrb[0].mxu0
    %182 = vdwg.mxu0
    %v183 = vmax.f32 %v177, 0.0
    %v184 = vmax.f32 %v180, 0.0
    %v185 = vpack.c.bf16 %v184, %v183
    %v186 = vld [vmem:[#allocation7] sm:$0xf]
    %v187 = vld [vmem:[#allocation7 + $0x4] sm:$0xf]
    %v188 = vld [vmem:[#allocation7 + $0x8] sm:$0xf]
    %v189 = vld [vmem:[#allocation7 + $0xc] sm:$0xf]
    %v190 = vld [vmem:[#allocation7 + $0x10] sm:$0xf]
    %v191 = vld [vmem:[#allocation7 + $0x14] sm:$0xf]
    %v192 = vld [vmem:[#allocation7 + $0x18] sm:$0xf]
    %v193 = vld [vmem:[#allocation7 + $0x1c] sm:$0xf]
    %v194 = vld [vmem:[#allocation7 + $0x20] sm:$0xf]
    %v195 = vld [vmem:[#allocation7 + $0x24] sm:$0xf]
    %v196 = vld [vmem:[#allocation7 + $0x28] sm:$0xf]
    %v197 = vld [vmem:[#allocation7 + $0x2c] sm:$0xf]
    %v198 = vld [vmem:[#allocation7 + $0x30] sm:$0xf]
    %v199 = vld [vmem:[#allocation7 + $0x34] sm:$0xf]
    %v200 = vld [vmem:[#allocation7 + $0x38] sm:$0xf]
    %v201 = vld [vmem:[#allocation7 + $0x3c] sm:$0xf]
    %v202 = vld [vmem:[%s4] sm:$0x1]
    %v204 = vlaneseq
    %v205 = vshrl.u32 %v204, 7
    %v206 = vsub.s32 0, %v205
    %v207 = vrot.slane %v202, %v206
    %v225 = vunpack.c.l.b16 %v186
    %v226 = vunpack.c.l.b16 %v187
    %v227 = vunpack.c.l.b16 %v188
    %v228 = vunpack.c.l.b16 %v189
    %v229 = vunpack.c.l.b16 %v190
    %v230 = vunpack.c.l.b16 %v191
    %v231 = vunpack.c.l.b16 %v192
    %v232 = vunpack.c.l.b16 %v193
    %v233 = vunpack.c.l.b16 %v194
    %v234 = vunpack.c.l.b16 %v195
    %v235 = vunpack.c.l.b16 %v196
    %v236 = vunpack.c.l.b16 %v197
    %v237 = vunpack.c.l.b16 %v198
    %v238 = vunpack.c.l.b16 %v199
    %v239 = vunpack.c.l.b16 %v200
    %v240 = vunpack.c.l.b16 %v201
    %v241 = vpack.c.b16 %v226, %v225
    %v242 = vpack.c.b16 %v228, %v227
    %v243 = vpack.c.b16 %v230, %v229
    %v244 = vpack.c.b16 %v232, %v231
    %v245 = vpack.c.b16 %v234, %v233
    %v246 = vpack.c.b16 %v236, %v235
    %v247 = vpack.c.b16 %v238, %v237
    %v248 = vpack.c.b16 %v240, %v239
    %257 = vmatprep.subr.bf16.mxu0 0
    %258 = vmatpush1.bf16.msra.mxu0 %v241
    %259 = vmatprep.subr.bf16.mxu0 0
    %260 = vmatpush1.bf16.msra.mxu0 %v242
    %261 = vmatprep.subr.bf16.mxu0 0
    %262 = vmatpush1.bf16.msra.mxu0 %v243
    %263 = vmatprep.subr.bf16.mxu0 0
    %264 = vmatpush1.bf16.msra.mxu0 %v244
    %265 = vmatprep.subr.bf16.mxu0 0
    %266 = vmatpush1.bf16.msra.mxu0 %v245
    %267 = vmatprep.subr.bf16.mxu0 0
    %268 = vmatpush1.bf16.msra.mxu0 %v246
    %269 = vmatprep.subr.bf16.mxu0 0
    %270 = vmatpush1.bf16.msra.mxu0 %v247
    %271 = vmatprep.subr.bf16.mxu0 0
    %272 = vmatpush1.bf16.msra.mxu0 %v248
    %273 = vmatprep.subr.bf16.mxu0 0
    %274 = vmatpush1.bf16.msra.mxu0 0
    %275 = vmatprep.subr.bf16.mxu0 0
    %276 = vmatpush1.bf16.msra.mxu0 0
    %277 = vmatprep.subr.bf16.mxu0 0
    %278 = vmatpush1.bf16.msra.mxu0 0
    %279 = vmatprep.subr.bf16.mxu0 0
    %280 = vmatpush1.bf16.msra.mxu0 0
    %281 = vmatprep.subr.bf16.mxu0 0
    %282 = vmatpush1.bf16.msra.mxu0 0
    %283 = vmatprep.subr.bf16.mxu0 0
    %284 = vmatpush1.bf16.msra.mxu0 0
    %285 = vmatprep.subr.bf16.mxu0 0
    %286 = vmatpush1.bf16.msra.mxu0 0
    %287 = vmatprep.subr.bf16.mxu0 0
    %288 = vmatpush1.bf16.msra.mxu0 0
    %289 = vmatprep.mubr.bf16.mxu0 0
    %290 = vmatmul.mubr.bf16.gmra.mrb[0].mxu0 %v185
    %v291 = vpop.f32.mrb[0].mxu0
    %v292 = vadd.f32 %v207, %v291
    %v293 = vpop.f32.mrb[0].mxu0
    %v294 = vpop.f32.mrb[0].mxu0
    %v295 = vadd.f32 %v207, %v294
    %v296 = vpop.f32.mrb[0].mxu0
    %297 = vdwg.mxu0
    %298 = vmax.xlane.f32.xlu0 %v292
    %v299 = vpop.xlane.xlu0 %298
    %300 = vmax.xlane.f32.xlu0 %v295
    %v301 = vpop.xlane.xlu0 %300
    %v302 = vsub.f32 %v292, %v299
    %v303 = vsub.f32 %v295, %v301
    %v304 = vmul.f32 %v302, 1.442695
    %v305 = vpow.pop %v304
    %v306 = vmul.f32 %v303, 1.442695
    %v307 = vpow.pop %v306
    %308 = vadd.xlane.f32.xlu0 %v305
    %v309 = vpop.xlane.xlu0 %308
    %310 = vadd.xlane.f32.xlu0 %v307
    %v311 = vpop.xlane.xlu0 %310
    %v312 = vrcp.pop %v309
    %v313 = vmul.f32 1.0, %v312
    %v314 = vrcp.pop %v311
    %v315 = vmul.f32 1.0, %v314
    %v316 = vmul.f32 %v305, %v313
    %v317 = vmul.f32 %v307, %v315
    %v318 = vpack.c.bf16 %v317, %v316
    %v320 = vunpack.c.l.b16 %v318
    %v321 = vunpack.c.h.b16 %v318
    %v322 = vpack.c.b16 %v320, %v320
    %v323 = vpack.c.b16 %v321, %v321
    %326 = vst [vmem:[#allocation8] sm:$0xf] %v322
    %327 = vst [vmem:[#allocation8 + $0x4] sm:$0xf] %v323
    // Predicated region
    $region34: #{tpu_custom_call.1} parent=1 // pred_check
      _
    $region35: #{tpu_custom_call.1} parent=1 // pred_check_branch
      %329 = sbr.rel (0) target = $region37
    $region36: #{tpu_custom_call.1} parent=1 // pred_region
      %s331 = ssub.s32 128, 128
      %332 = vsyncadd [#allocation4], %s331
      %s333 = sshll.u32 [#allocation8], 4
      %s334 = int_to_ptr.vmem [resolvable:$true] %s333
      %339 = dma.vmem_to_hbm [thread:$0]  %s334, 128, %s5, [#allocation4], 64, 64, 4
    $region37: #{tpu_custom_call.1} parent=1 // pred_fallthru
      _
    // Predicated region
    $region38: #{tpu_custom_call.1} parent=1 // pred_check
      _
    $region39: #{tpu_custom_call.1} parent=1 // pred_check_branch
      %341 = sbr.rel (0) target = $region41
    $region40: #{tpu_custom_call.1} parent=1 // pred_region
      %342 = dma.done [#allocation4], 128
    $region41: #{tpu_custom_call.1} parent=1 // pred_fallthru
      _
    %343 = vsyncpa [#allocation3], 1
    %344 = vsyncpa [#allocation6], 1
    %345 = vsyncpa [#allocation4], 1

</llo_original>
